<compile_context>
chip_gen: v7x
topology: tpu7x:2x2x1
jax: 0.10.0
libtpu: 0.0.40
codegen_flags: <defaults>
</compile_context>

<pallas_src>
import functools

import jax
import jax.numpy as jnp
from jax.experimental import pallas as pl
from jax.experimental.pallas import tpu as pltpu


def _round_up(x, m):
    return ((x + m - 1) // m) * m


def _ffn_kernel(x_ref, w1_ref, b1_ref, w2_ref, b2_ref, o_ref, *, activation):
    # x_ref : (tm, d_model)    current row tile (compute dtype, e.g. bf16) -- pipelined
    # w1_ref: (d_model, d_ff)  resident in VMEM (compute dtype)
    # b1_ref: (1, d_ff)        f32, resident
    # w2_ref: (d_ff, d_model)  resident in VMEM (compute dtype)
    # b2_ref: (1, d_model)     f32, resident
    x = x_ref[...]

    # conv1 (1x1 conv == matmul over channels): bf16 MXU inputs, f32 accumulation + bias.
    h = jnp.dot(x, w1_ref[...], preferred_element_type=jnp.float32) + b1_ref[...]

    if activation == "relu":
        h = jnp.maximum(h, 0.0)
    else:  # exact (erf) gelu, matches F.gelu default
        h = jax.nn.gelu(h, approximate=False)

    # dropout: identity in eval mode

    # conv2: cast back to compute dtype for the MXU, accumulate in f32, f32 bias.
    y = jnp.dot(h.astype(w2_ref.dtype), w2_ref[...],
                preferred_element_type=jnp.float32) + b2_ref[...]

    o_ref[...] = y.astype(o_ref.dtype)


def prepare_ffn_params(w1, b1, w2, b2, compute_dtype=jnp.bfloat16):
    """One-time glue: Conv1d weights (out, in, 1) -> matmul layout + compute dtype.

    Do this once (or under jit, outside the hot path) so the transpose/cast is not
    re-materialized in HBM on every forward call.
    """
    w1t = jnp.transpose(w1[:, :, 0], (1, 0)).astype(compute_dtype)   # (d_model, d_ff)
    w2t = jnp.transpose(w2[:, :, 0], (1, 0)).astype(compute_dtype)   # (d_ff, d_model)
    b1r = b1.reshape(1, -1).astype(jnp.float32)                      # (1, d_ff)
    b2r = b2.reshape(1, -1).astype(jnp.float32)                      # (1, d_model)
    return w1t, b1r, w2t, b2r


def conv_ffn_forward(x, w1, b1, w2, b2, *, activation="relu", tm=256,
                     compute_dtype=jnp.bfloat16,
                     vmem_limit_bytes=48 * 1024 * 1024):
    """x: (B, L, d_model); w1: (d_ff, d_model, 1); b1: (d_ff,);
    w2: (d_model, d_ff, 1); b2: (d_model,).  Returns (B, L, d_model) in x.dtype."""
    B, L, d_model = x.shape
    d_ff = w1.shape[0]
    out_dtype = x.dtype

    w1t, b1r, w2t, b2r = prepare_ffn_params(w1, b1, w2, b2, compute_dtype)

    # Row tiling: multiple of 8 (sublane), capped by the row count; pad M so any B*L works.
    M = B * L
    tm_eff = max(8, _round_up(min(tm, M), 8))
    M_pad = _round_up(M, tm_eff)

    x2d = x.reshape(M, d_model).astype(compute_dtype)
    if M_pad != M:
        x2d = jnp.pad(x2d, ((0, M_pad - M), (0, 0)))

    grid = (M_pad // tm_eff,)
    kernel = functools.partial(_ffn_kernel, activation=activation)

    bytes_accessed = int(
        x2d.size * x2d.dtype.itemsize
        + w1t.size * w1t.dtype.itemsize
        + w2t.size * w2t.dtype.itemsize
        + b1r.size * b1r.dtype.itemsize
        + b2r.size * b2r.dtype.itemsize
        + M_pad * d_model * x.dtype.itemsize)
    cost = pl.CostEstimate(
        flops=int(4 * M_pad * d_model * d_ff),
        transcendentals=0 if activation == "relu" else int(M_pad * d_ff),
        bytes_accessed=bytes_accessed,
    )

    # Weights/biases: whole-array VMEM residents (single copy, single buffer).
    resident = lambda: pl.BlockSpec(memory_space=pltpu.MemorySpace.VMEM)

    out2d = pl.pallas_call(
        kernel,
        out_shape=jax.ShapeDtypeStruct((M_pad, d_model), out_dtype),
        grid_spec=pltpu.PrefetchScalarGridSpec(
            num_scalar_prefetch=0,
            grid=grid,
            in_specs=[
                pl.BlockSpec((tm_eff, d_model), lambda i: (i, 0)),  # x row tile (pipelined)
                resident(),   # W1^T
                resident(),   # b1
                resident(),   # W2^T
                resident(),   # b2
            ],
            out_specs=pl.BlockSpec((tm_eff, d_model), lambda i: (i, 0)),
        ),
        compiler_params=pltpu.CompilerParams(
            dimension_semantics=("parallel",),        # shards rows across TCs on v7x
            vmem_limit_bytes=vmem_limit_bytes,
        ),
        cost_estimate=cost,
    )(x2d, w1t, b1r, w2t, b2r)

    if M_pad != M:
        out2d = out2d[:M]
    return out2d.reshape(B, L, d_model)


# ----------------------------- references / checks ----------------------------------

def _reference_f32(x, w1, b1, w2, b2, activation):
    # Pure-JAX f32 reference mirroring the PyTorch module (eval mode).
    h = jnp.einsum("bld,fd->blf", x, w1[:, :, 0],
                   preferred_element_type=jnp.float32) + b1
    h = jnp.maximum(h, 0.0) if activation == "relu" else jax.nn.gelu(h, approximate=False)
    y = jnp.einsum("blf,df->bld", h, w2[:, :, 0],
                   preferred_element_type=jnp.float32) + b2
    return y


def _reference_matched(x, w1, b1, w2, b2, activation, compute_dtype):
    # Mirrors the kernel's numerics: bf16 matmul inputs, f32 accumulation/bias/activation.
    f32 = jnp.float32
    xq = x.astype(compute_dtype).astype(f32)
    w1q = w1[:, :, 0].astype(compute_dtype).astype(f32)
    w2q = w2[:, :, 0].astype(compute_dtype).astype(f32)
    h = jnp.einsum("bld,fd->blf", xq, w1q, preferred_element_type=f32) + b1
    h = jnp.maximum(h, 0.0) if activation == "relu" else jax.nn.gelu(h, approximate=False)
    hq = h.astype(compute_dtype).astype(f32)
    y = jnp.einsum("blf,df->bld", hq, w2q, preferred_element_type=f32) + b2
    return y


def _check(out, x, w1, b1, w2, b2, activation, compute_dtype):
    ref_f32 = _reference_f32(x, w1, b1, w2, b2, activation)
    ref_mat = _reference_matched(x, w1, b1, w2, b2, activation, compute_dtype)
    assert out.shape == ref_f32.shape
    assert jnp.allclose(out, ref_mat, atol=2e-3, rtol=2e-3), \
        "mismatch vs matched-precision reference"
    assert jnp.allclose(out, ref_f32, atol=1e-1, rtol=1e-1), \
        "mismatch vs f32 reference"


if __name__ == "__main__":
    def make_inputs(key, B, L, d_model, d_ff):
        kx, k1, kb1, k2, kb2 = jax.random.split(key, 5)
        x = jax.random.normal(kx, (B, L, d_model), dtype=jnp.float32)
        # Conv1d parameter shapes: weight (out, in, kernel=1), bias (out,)
        w1 = jax.random.normal(k1, (d_ff, d_model, 1), dtype=jnp.float32) * 0.1
        b1 = jax.random.normal(kb1, (d_ff,), dtype=jnp.float32) * 0.1
        w2 = jax.random.normal(k2, (d_model, d_ff, 1), dtype=jnp.float32) * 0.1
        b2 = jax.random.normal(kb2, (d_model,), dtype=jnp.float32) * 0.1
        return x, w1, b1, w2, b2

    # Case 1: small module-like shape (B=2, L=8, d_model=16, d_ff=32), relu.
    x, w1, b1, w2, b2 = make_inputs(jax.random.PRNGKey(0), 2, 8, 16, 32)
    out = conv_ffn_forward(x, w1, b1, w2, b2, activation="relu")
    out = jax.block_until_ready(out)
    _check(out, x, w1, b1, w2, b2, "relu", jnp.bfloat16)

    # Case 2: lane-dense channels + ragged row count (M=1200 -> padded to 1280,
    # default tm=256, multi-step "parallel" grid).
    x, w1, b1, w2, b2 = make_inputs(jax.random.PRNGKey(1), 4, 300, 128, 256)
    out = conv_ffn_forward(x, w1, b1, w2, b2, activation="relu")
    out = jax.block_until_ready(out)
    _check(out, x, w1, b1, w2, b2, "relu", jnp.bfloat16)

    print("KERNEL_OK")
</pallas_src>

<mosaic_0001>
module attributes {stable_mosaic.version = 11 : i64} {
  func.func @_ffn_kernel(%arg0: i32, %arg1: memref<16x16xbf16, #tpu.memory_space<vmem>>, %arg2: memref<16x32xbf16, #tpu.memory_space<vmem>>, %arg3: memref<1x32xf32, #tpu.memory_space<vmem>>, %arg4: memref<32x16xbf16, #tpu.memory_space<vmem>>, %arg5: memref<1x16xf32, #tpu.memory_space<vmem>>, %arg6: memref<16x16xf32, #tpu.memory_space<vmem>>) attributes {dimension_semantics = [#tpu.dimension_semantics<parallel>], iteration_bounds = array<i64: 1>, scalar_prefetch = 0 : i64, scratch_operands = 0 : i64, tpu.core_type = #tpu.core_type<tc>, window_params = [{transform_indices = @transform_0, window_bounds = array<i64: 16, 16>}, {pipeline_mode = #tpu.pipeline_mode<synchronous>, transform_indices = @transform_1, window_bounds = array<i64: 16, 32>}, {pipeline_mode = #tpu.pipeline_mode<synchronous>, transform_indices = @transform_2, window_bounds = array<i64: 1, 32>}, {pipeline_mode = #tpu.pipeline_mode<synchronous>, transform_indices = @transform_3, window_bounds = array<i64: 32, 16>}, {pipeline_mode = #tpu.pipeline_mode<synchronous>, transform_indices = @transform_4, window_bounds = array<i64: 1, 16>}, {transform_indices = @transform_5, window_bounds = array<i64: 16, 16>}]} {
    %c0 = arith.constant 0 : index
    %c0_0 = arith.constant 0 : index
    %0 = vector.load %arg1[%c0, %c0_0] : memref<16x16xbf16, #tpu.memory_space<vmem>>, vector<16x16xbf16>
    %c0_1 = arith.constant 0 : index
    %c0_2 = arith.constant 0 : index
    %1 = vector.load %arg2[%c0_1, %c0_2] : memref<16x32xbf16, #tpu.memory_space<vmem>>, vector<16x32xbf16>
    %cst = arith.constant dense<0.000000e+00> : vector<16x32xf32>
    %2 = tpu.matmul %0, %1, %cst {dimension_numbers = #tpu.dot_dimension_numbers<[1], [0], [0], [1], [0, 0, 1, 1], [], []>} : vector<16x16xbf16>, vector<16x32xbf16>, vector<16x32xf32> -> vector<16x32xf32>
    %c0_3 = arith.constant 0 : index
    %c0_4 = arith.constant 0 : index
    %3 = vector.load %arg3[%c0_3, %c0_4] : memref<1x32xf32, #tpu.memory_space<vmem>>, vector<1x32xf32>
    %4 = vector.broadcast %3 : vector<1x32xf32> to vector<16x32xf32>
    %5 = arith.addf %2, %4 : vector<16x32xf32>
    %cst_5 = arith.constant 0.000000e+00 : f32
    %6 = vector.broadcast %cst_5 : f32 to vector<16x32xf32>
    %7 = arith.maximumf %5, %6 : vector<16x32xf32>
    %8 = arith.truncf %7 : vector<16x32xf32> to vector<16x32xbf16>
    %c0_6 = arith.constant 0 : index
    %c0_7 = arith.constant 0 : index
    %9 = vector.load %arg4[%c0_6, %c0_7] : memref<32x16xbf16, #tpu.memory_space<vmem>>, vector<32x16xbf16>
    %cst_8 = arith.constant dense<0.000000e+00> : vector<16x16xf32>
    %10 = tpu.matmul %8, %9, %cst_8 {dimension_numbers = #tpu.dot_dimension_numbers<[1], [0], [0], [1], [0, 0, 1, 1], [], []>} : vector<16x32xbf16>, vector<32x16xbf16>, vector<16x16xf32> -> vector<16x16xf32>
    %c0_9 = arith.constant 0 : index
    %c0_10 = arith.constant 0 : index
    %11 = vector.load %arg5[%c0_9, %c0_10] : memref<1x16xf32, #tpu.memory_space<vmem>>, vector<1x16xf32>
    %12 = vector.broadcast %11 : vector<1x16xf32> to vector<16x16xf32>
    %13 = arith.addf %10, %12 : vector<16x16xf32>
    %c0_11 = arith.constant 0 : index
    %c0_12 = arith.constant 0 : index
    %14 = vector.load %arg6[%c0_11, %c0_12] : memref<16x16xf32, #tpu.memory_space<vmem>>, vector<16x16xf32>
    tpu.vector_store %arg6[%c0_11, %c0_12], %13 {strides = array<i32>} : memref<16x16xf32, #tpu.memory_space<vmem>>, vector<16x16xf32>,
    return
  }
  func.func @transform_0(%arg0: i32) -> (i32, i32) {
    %c0_i32 = arith.constant 0 : i32
    %c0_i32_0 = arith.constant 0 : i32
    return %arg0, %c0_i32 : i32, i32
  }
  func.func @transform_1(%arg0: i32) -> (i32, i32) {
    %c0_i32 = arith.constant 0 : i32
    %c0_i32_0 = arith.constant 0 : i32
    %c0_i32_1 = arith.constant 0 : i32
    return %c0_i32, %c0_i32_0 : i32, i32
  }
  func.func @transform_2(%arg0: i32) -> (i32, i32) {
    %c0_i32 = arith.constant 0 : i32
    %c0_i32_0 = arith.constant 0 : i32
    %c0_i32_1 = arith.constant 0 : i32
    return %c0_i32, %c0_i32_0 : i32, i32
  }
  func.func @transform_3(%arg0: i32) -> (i32, i32) {
    %c0_i32 = arith.constant 0 : i32
    %c0_i32_0 = arith.constant 0 : i32
    %c0_i32_1 = arith.constant 0 : i32
    return %c0_i32, %c0_i32_0 : i32, i32
  }
  func.func @transform_4(%arg0: i32) -> (i32, i32) {
    %c0_i32 = arith.constant 0 : i32
    %c0_i32_0 = arith.constant 0 : i32
    %c0_i32_1 = arith.constant 0 : i32
    return %c0_i32, %c0_i32_0 : i32, i32
  }
  func.func @transform_5(%arg0: i32) -> (i32, i32) {
    %c0_i32 = arith.constant 0 : i32
    %c0_i32_0 = arith.constant 0 : i32
    return %arg0, %c0_i32 : i32, i32
  }
}

</mosaic_0001>

<llo_original>
// kernel: tpu_custom_call.1
$region0: #{tpu_custom_call.1}
  #allocation0 [shape = 'u32[]', space=smem, size = 0x4, offset = 0x4, fixed_abs, tag = 'smem constant byte address 0x4 - core index']
  #allocation1 [shape = 'u32[144,128]{1,0:T(1,128)}', space=vmem, size = 0x12000, scoped, tag = 'internal scratch']
  %s0 = inlined_call_operand.vmem [shape: bf16[16,16], index: 0, kind: input, shape index: {}]
  %s1 = inlined_call_operand.vmem [shape: bf16[16,32], index: 1, kind: input, shape index: {}]
  %s2 = inlined_call_operand.vmem [shape: f32[1,32], index: 2, kind: input, shape index: {}]
  %s3 = inlined_call_operand.vmem [shape: bf16[32,16], index: 3, kind: input, shape index: {}]
  %s4 = inlined_call_operand.vmem [shape: f32[1,16], index: 4, kind: input, shape index: {}]
  %s5 = inlined_call_operand.hbm [shape: f32[16,16], index: 5, kind: output, shape index: {}]
  %s6 = sld [smem:[#allocation0]]
  $region30: #{tpu_custom_call.1} parent=0
    _
  %s8 = ssub.s32 1, %s6
  %s9 = scalar_select 0, %s8, %s6
  $region1: #{tpu_custom_call.1} parent=0
    #allocation2 [shape = 'u8[8192]{0}', space=vmem, size = 0x2000, scoped, tag = 'output window, operand 0, single buffered']
    #allocation3 [shape = 's32[1]{0}', space=sflag, size = 0x4, scoped, tag = 'scoped memory for tpu_custom_call.1']
    %10 = vsyncpa [#allocation3], 0
    // Predicated region
    $region2: #{tpu_custom_call.1} parent=1 // pred_check
      _
    $region3: #{tpu_custom_call.1} parent=1 // pred_check_branch
      %12 = sbr.rel (0) target = $region5
    $region4: #{tpu_custom_call.1} parent=1 // pred_region
      _
    $region5: #{tpu_custom_call.1} parent=1 // pred_fallthru
      _
    // Predicated region
    $region6: #{tpu_custom_call.1} parent=1 // pred_check
      _
    $region7: #{tpu_custom_call.1} parent=1 // pred_check_branch
      %14 = sbr.rel (0) target = $region9
    $region8: #{tpu_custom_call.1} parent=1 // pred_region
      _
    $region9: #{tpu_custom_call.1} parent=1 // pred_fallthru
      _
    // Predicated region
    $region10: #{tpu_custom_call.1} parent=1 // pred_check
      _
    $region11: #{tpu_custom_call.1} parent=1 // pred_check_branch
      %16 = sbr.rel (0) target = $region13
    $region12: #{tpu_custom_call.1} parent=1 // pred_region
      _
    $region13: #{tpu_custom_call.1} parent=1 // pred_fallthru
      _
    // Predicated region
    $region14: #{tpu_custom_call.1} parent=1 // pred_check
      _
    $region15: #{tpu_custom_call.1} parent=1 // pred_check_branch
      %18 = sbr.rel (0) target = $region17
    $region16: #{tpu_custom_call.1} parent=1 // pred_region
      _
    $region17: #{tpu_custom_call.1} parent=1 // pred_fallthru
      _
    // Predicated region
    $region18: #{tpu_custom_call.1} parent=1 // pred_check
      _
    $region19: #{tpu_custom_call.1} parent=1 // pred_check_branch
      %20 = sbr.rel (0) target = $region21
    $region20: #{tpu_custom_call.1} parent=1 // pred_region
      _
    $region21: #{tpu_custom_call.1} parent=1 // pred_fallthru
      _
    %v22 = vld [vmem:[%s0] sm:$0xf]
    %v23 = vld [vmem:[%s0 + $0x4] sm:$0xf]
    %v24 = vld [vmem:[%s1] sm:$0xf]
    %v25 = vld [vmem:[%s1 + $0x4] sm:$0xf]
    %v26 = vld [vmem:[%s2] sm:$0x1]
    %v28 = vlaneseq
    %v29 = vshrl.u32 %v28, 7
    %v30 = vsub.s32 0, %v29
    %v31 = vrot.slane %v26, %v30
    %v35 = vunpack.c.l.b16 %v22
    %v36 = vunpack.c.l.b16 %v23
    %v37 = vpack.c.b16 %v36, %v35
    %v40 = vunpack.c.l.b16 %v24
    %v41 = vunpack.c.l.b16 %v25
    %v42 = vpack.c.b16 %v41, %v40
    %vm44 = vcmask 130048
    %v46 = vsel %vm44, %v37, 0
    %48 = vmatprep.subr.bf16.mxu0 0
    %49 = vmatpush1.bf16.msra.mxu0 %v42
    %50 = vmatprep.subr.bf16.mxu0 0
    %51 = vmatpush1.bf16.msra.mxu0 0
    %52 = vmatprep.subr.bf16.mxu0 0
    %53 = vmatpush1.bf16.msra.mxu0 0
    %54 = vmatprep.subr.bf16.mxu0 0
    %55 = vmatpush1.bf16.msra.mxu0 0
    %56 = vmatprep.subr.bf16.mxu0 0
    %57 = vmatpush1.bf16.msra.mxu0 0
    %58 = vmatprep.subr.bf16.mxu0 0
    %59 = vmatpush1.bf16.msra.mxu0 0
    %60 = vmatprep.subr.bf16.mxu0 0
    %61 = vmatpush1.bf16.msra.mxu0 0
    %62 = vmatprep.subr.bf16.mxu0 0
    %63 = vmatpush1.bf16.msra.mxu0 0
    %64 = vmatprep.subr.bf16.mxu0 0
    %65 = vmatpush1.bf16.msra.mxu0 0
    %66 = vmatprep.subr.bf16.mxu0 0
    %67 = vmatpush1.bf16.msra.mxu0 0
    %68 = vmatprep.subr.bf16.mxu0 0
    %69 = vmatpush1.bf16.msra.mxu0 0
    %70 = vmatprep.subr.bf16.mxu0 0
    %71 = vmatpush1.bf16.msra.mxu0 0
    %72 = vmatprep.subr.bf16.mxu0 0
    %73 = vmatpush1.bf16.msra.mxu0 0
    %74 = vmatprep.subr.bf16.mxu0 0
    %75 = vmatpush1.bf16.msra.mxu0 0
    %76 = vmatprep.subr.bf16.mxu0 0
    %77 = vmatpush1.bf16.msra.mxu0 0
    %78 = vmatprep.subr.bf16.mxu0 0
    %79 = vmatpush1.bf16.msra.mxu0 0
    %80 = vmatprep.mubr.bf16.mxu0 0
    %81 = vmatmul.mubr.bf16.gmra.mrb[0].mxu0 %v46
    %v82 = vpop.f32.mrb[0].mxu0
    %v83 = vadd.f32 %v31, %v82
    %v84 = vpop.f32.mrb[0].mxu0
    %v85 = vpop.f32.mrb[0].mxu0
    %v86 = vadd.f32 %v31, %v85
    %v87 = vpop.f32.mrb[0].mxu0
    %88 = vdwg.mxu0
    %v89 = vmax.f32 %v83, 0.0
    %v90 = vmax.f32 %v86, 0.0
    %v91 = vpack.c.bf16 %v90, %v89
    %v92 = vld [vmem:[%s3] sm:$0xf]
    %v93 = vld [vmem:[%s3 + $0x4] sm:$0xf]
    %v94 = vld [vmem:[%s3 + $0x8] sm:$0xf]
    %v95 = vld [vmem:[%s3 + $0xc] sm:$0xf]
    %v96 = vld [vmem:[%s4] sm:$0x1]
    %v98 = vlaneseq
    %v99 = vshrl.u32 %v98, 7
    %v100 = vsub.s32 0, %v99
    %v101 = vrot.slane %v96, %v100
    %v107 = vunpack.c.l.b16 %v92
    %v108 = vunpack.c.l.b16 %v93
    %v109 = vunpack.c.l.b16 %v94
    %v110 = vunpack.c.l.b16 %v95
    %v111 = vpack.c.b16 %v108, %v107
    %v112 = vpack.c.b16 %v110, %v109
    %vm115 = vcmask 261120
    %v117 = vsel %vm115, %v91, 0
    %119 = vmatprep.subr.bf16.mxu0 0
    %120 = vmatpush1.bf16.msra.mxu0 %v111
    %121 = vmatprep.subr.bf16.mxu0 0
    %122 = vmatpush1.bf16.msra.mxu0 %v112
    %123 = vmatprep.subr.bf16.mxu0 0
    %124 = vmatpush1.bf16.msra.mxu0 0
    %125 = vmatprep.subr.bf16.mxu0 0
    %126 = vmatpush1.bf16.msra.mxu0 0
    %127 = vmatprep.subr.bf16.mxu0 0
    %128 = vmatpush1.bf16.msra.mxu0 0
    %129 = vmatprep.subr.bf16.mxu0 0
    %130 = vmatpush1.bf16.msra.mxu0 0
    %131 = vmatprep.subr.bf16.mxu0 0
    %132 = vmatpush1.bf16.msra.mxu0 0
    %133 = vmatprep.subr.bf16.mxu0 0
    %134 = vmatpush1.bf16.msra.mxu0 0
    %135 = vmatprep.subr.bf16.mxu0 0
    %136 = vmatpush1.bf16.msra.mxu0 0
    %137 = vmatprep.subr.bf16.mxu0 0
    %138 = vmatpush1.bf16.msra.mxu0 0
    %139 = vmatprep.subr.bf16.mxu0 0
    %140 = vmatpush1.bf16.msra.mxu0 0
    %141 = vmatprep.subr.bf16.mxu0 0
    %142 = vmatpush1.bf16.msra.mxu0 0
    %143 = vmatprep.subr.bf16.mxu0 0
    %144 = vmatpush1.bf16.msra.mxu0 0
    %145 = vmatprep.subr.bf16.mxu0 0
    %146 = vmatpush1.bf16.msra.mxu0 0
    %147 = vmatprep.subr.bf16.mxu0 0
    %148 = vmatpush1.bf16.msra.mxu0 0
    %149 = vmatprep.subr.bf16.mxu0 0
    %150 = vmatpush1.bf16.msra.mxu0 0
    %151 = vmatprep.mubr.bf16.mxu0 0
    %152 = vmatmul.mubr.bf16.gmra.mrb[0].mxu0 %v117
    %v153 = vpop.f32.mrb[0].mxu0
    %v154 = vadd.f32 %v101, %v153
    %v155 = vpop.f32.mrb[0].mxu0
    %v156 = vpop.f32.mrb[0].mxu0
    %v157 = vadd.f32 %v101, %v156
    %v158 = vpop.f32.mrb[0].mxu0
    %159 = vdwg.mxu0
    %160 = vst.msk [vmem:[#allocation2] sm:$0xff] %vm44, %v154
    %161 = vst.msk [vmem:[#allocation2 + $0x8] sm:$0xff] %vm44, %v157
    // Predicated region
    $region22: #{tpu_custom_call.1} parent=1 // pred_check
      _
    $region23: #{tpu_custom_call.1} parent=1 // pred_check_branch
      %163 = sbr.rel (0) target = $region25
    $region24: #{tpu_custom_call.1} parent=1 // pred_region
      %s165 = ssub.s32 256, 256
      %166 = vsyncadd [#allocation3], %s165
      %s167 = sshll.u32 [#allocation2], 4
      %s168 = int_to_ptr.vmem [resolvable:$true] %s167
      %173 = dma.vmem_to_hbm [thread:$0]  %s168, 256, %s5, [#allocation3], 128, 128, 8
    $region25: #{tpu_custom_call.1} parent=1 // pred_fallthru
      _
    // Predicated region
    $region26: #{tpu_custom_call.1} parent=1 // pred_check
      _
    $region27: #{tpu_custom_call.1} parent=1 // pred_check_branch
      %175 = sbr.rel (0) target = $region29
    $region28: #{tpu_custom_call.1} parent=1 // pred_region
      %176 = dma.done [#allocation3], 256
    $region29: #{tpu_custom_call.1} parent=1 // pred_fallthru
      _
    %177 = vsyncpa [#allocation3], 1

</llo_original>
